<compile_context>
chip_gen: v7x
topology: tpu7x:2x2x1
jax: 0.10.0
libtpu: 0.0.40
codegen_flags: <defaults>
</compile_context>

<pallas_src>
import jax
import jax.numpy as jnp
from jax.experimental import pallas as pl
from jax.experimental.pallas import tpu as pltpu

LANE = 128  # TPU lane width — fc_out is padded to this many output columns.


def _round_up(n, m):
    return ((n + m - 1) // m) * m


def qvalue_kernel(x_ref, a_ref, w1s_ref, w1a_ref, b1_ref,
                  w2_ref, b2_ref, w3_ref, b3_ref, out_ref):
    # fc1 (split over [state | action] inputs) + relu, f32 accumulation.
    h1 = (jnp.dot(x_ref[...], w1s_ref[...], preferred_element_type=jnp.float32)
          + jnp.dot(a_ref[...], w1a_ref[...], preferred_element_type=jnp.float32)
          + b1_ref[...])
    h1 = jnp.maximum(h1, 0.0)
    # fc2 + relu
    h2 = jnp.dot(h1, w2_ref[...], preferred_element_type=jnp.float32) + b2_ref[...]
    h2 = jnp.maximum(h2, 0.0)
    # fc_out (lane-padded to 128 columns -> unmasked full-lane store)
    out_ref[...] = (jnp.dot(h2, w3_ref[...], preferred_element_type=jnp.float32)
                    + b3_ref[...]).astype(out_ref.dtype)


def qvalue_net_continuous(x, a, params, *, block_b=1024):
    """Pallas forward pass. x: (B, state_dim), a: (B, action_dim)."""
    w1s, w1a, b1, w2, b2, w3, b3 = params
    B, S = x.shape
    A = a.shape[1]
    H = w2.shape[0]
    action_dim = w3.shape[1]

    # Pad fc_out to a full 128-lane output (zero columns) so the final store
    # is lane-dense; sliced back to action_dim below. Padding cost is tiny.
    w3p = jnp.zeros((H, LANE), w3.dtype).at[:, :action_dim].set(w3)
    b3p = jnp.zeros((1, LANE), b3.dtype).at[:, :action_dim].set(b3)

    # Batch tiling: TB rows per grid step, multiple of 8 (f32 sublanes).
    tb = min(block_b, _round_up(B, 8))
    Bp = _round_up(B, tb)
    if Bp != B:
        x = jnp.pad(x, ((0, Bp - B), (0, 0)))
        a = jnp.pad(a, ((0, Bp - B), (0, 0)))
    grid = (Bp // tb,)

    def act_spec(feat):
        return pl.BlockSpec((tb, feat), lambda i: (i, 0))

    def res_spec(shape):
        # Same block for every grid step -> weights/biases stay VMEM-resident.
        return pl.BlockSpec(shape, lambda i: (0, 0))

    flops = 2 * Bp * (S * H + A * H + H * H + H * LANE)
    bytes_accessed = 4 * (Bp * (S + A + LANE)
                          + (S + A) * H + H * H + H * LANE + 2 * H + LANE)
    cost = pl.CostEstimate(flops=flops, transcendentals=0,
                           bytes_accessed=bytes_accessed)

    out = pl.pallas_call(
        qvalue_kernel,
        out_shape=jax.ShapeDtypeStruct((Bp, LANE), jnp.float32),
        grid=grid,
        in_specs=[
            act_spec(S),            # x tile
            act_spec(A),            # a tile
            res_spec((S, H)),       # W1[:S]
            res_spec((A, H)),       # W1[S:]
            res_spec((1, H)),       # b1
            res_spec((H, H)),       # W2
            res_spec((1, H)),       # b2
            res_spec((H, LANE)),    # W3 (lane-padded)
            res_spec((1, LANE)),    # b3 (lane-padded)
        ],
        out_specs=pl.BlockSpec((tb, LANE), lambda i: (i, 0)),
        compiler_params=pltpu.CompilerParams(
            dimension_semantics=("parallel",),       # shard batch tiles over TCs (v7x)
            vmem_limit_bytes=32 * 1024 * 1024,       # v7x-safe scoped VMEM budget
        ),
        cost_estimate=cost,
    )(x, a, w1s, w1a, b1, w2, b2, w3p, b3p)

    return out[:B, :action_dim]


def init_params(key, state_dim, hidden_dim, action_dim):
    """Init matching torch.nn.Linear default (U[-1/sqrt(fan_in), +1/sqrt(fan_in)]).

    fc1's weight is generated as a single (S+A, H) matrix (same distribution as
    torch) and then split into the state / action halves used by the kernel.
    """
    def linear(key, fan_in, fan_out):
        kw, kb = jax.random.split(key)
        bound = 1.0 / jnp.sqrt(float(fan_in))
        w = jax.random.uniform(kw, (fan_in, fan_out), jnp.float32,
                               minval=-bound, maxval=bound)
        b = jax.random.uniform(kb, (1, fan_out), jnp.float32,
                               minval=-bound, maxval=bound)
        return w, b

    k1, k2, k3 = jax.random.split(key, 3)
    w1, b1 = linear(k1, state_dim + action_dim, hidden_dim)
    w1s, w1a = w1[:state_dim], w1[state_dim:]
    w2, b2 = linear(k2, hidden_dim, hidden_dim)
    w3, b3 = linear(k3, hidden_dim, action_dim)
    return (w1s, w1a, b1, w2, b2, w3, b3)


def reference_forward(x, a, params):
    """Pure-JAX reference mirroring the original torch.cat formulation."""
    w1s, w1a, b1, w2, b2, w3, b3 = params
    cat = jnp.concatenate([x, a], axis=1)
    w1 = jnp.concatenate([w1s, w1a], axis=0)
    h1 = jnp.maximum(cat @ w1 + b1, 0.0)
    h2 = jnp.maximum(h1 @ w2 + b2, 0.0)
    return h2 @ w3 + b3


if __name__ == "__main__":
    state_dim, hidden_dim, action_dim = 16, 32, 4

    key = jax.random.PRNGKey(0)
    k_params, k_x, k_a = jax.random.split(key, 3)
    params = init_params(k_params, state_dim, hidden_dim, action_dim)

    # Case 1: batch already a multiple of the sublane tile.
    x = jax.random.normal(k_x, (8, state_dim), jnp.float32)
    a = jax.random.normal(k_a, (8, action_dim), jnp.float32)
    q = qvalue_net_continuous(x, a, params)
    jax.block_until_ready(q)
    q_ref = reference_forward(x, a, params)
    assert q.shape == (8, action_dim)
    assert jnp.allclose(q, q_ref, atol=1e-4, rtol=1e-5), "mismatch vs reference (B=8)"

    # Case 2: ragged batch exercising the pad-and-slice path.
    x2 = jax.random.normal(jax.random.PRNGKey(1), (10, state_dim), jnp.float32)
    a2 = jax.random.normal(jax.random.PRNGKey(2), (10, action_dim), jnp.float32)
    q2 = qvalue_net_continuous(x2, a2, params)
    jax.block_until_ready(q2)
    q2_ref = reference_forward(x2, a2, params)
    assert q2.shape == (10, action_dim)
    assert jnp.allclose(q2, q2_ref, atol=1e-4, rtol=1e-5), "mismatch vs reference (B=10)"

    print("KERNEL_OK")
</pallas_src>

<mosaic_0001>
module attributes {stable_mosaic.version = 11 : i64} {
  func.func @qvalue_kernel(%arg0: i32, %arg1: memref<8x16xf32, #tpu.memory_space<vmem>>, %arg2: memref<8x4xf32, #tpu.memory_space<vmem>>, %arg3: memref<16x32xf32, #tpu.memory_space<vmem>>, %arg4: memref<4x32xf32, #tpu.memory_space<vmem>>, %arg5: memref<1x32xf32, #tpu.memory_space<vmem>>, %arg6: memref<32x32xf32, #tpu.memory_space<vmem>>, %arg7: memref<1x32xf32, #tpu.memory_space<vmem>>, %arg8: memref<32x128xf32, #tpu.memory_space<vmem>>, %arg9: memref<1x128xf32, #tpu.memory_space<vmem>>, %arg10: memref<8x128xf32, #tpu.memory_space<vmem>>) attributes {dimension_semantics = [#tpu.dimension_semantics<parallel>], iteration_bounds = array<i64: 1>, scalar_prefetch = 0 : i64, scratch_operands = 0 : i64, tpu.core_type = #tpu.core_type<tc>, window_params = [{transform_indices = @transform_0, window_bounds = array<i64: 8, 16>}, {transform_indices = @transform_1, window_bounds = array<i64: 8, 4>}, {pipeline_mode = #tpu.pipeline_mode<synchronous>, transform_indices = @transform_2, window_bounds = array<i64: 16, 32>}, {pipeline_mode = #tpu.pipeline_mode<synchronous>, transform_indices = @transform_3, window_bounds = array<i64: 4, 32>}, {pipeline_mode = #tpu.pipeline_mode<synchronous>, transform_indices = @transform_4, window_bounds = array<i64: 1, 32>}, {pipeline_mode = #tpu.pipeline_mode<synchronous>, transform_indices = @transform_5, window_bounds = array<i64: 32, 32>}, {pipeline_mode = #tpu.pipeline_mode<synchronous>, transform_indices = @transform_6, window_bounds = array<i64: 1, 32>}, {pipeline_mode = #tpu.pipeline_mode<synchronous>, transform_indices = @transform_7, window_bounds = array<i64: 32, 128>}, {pipeline_mode = #tpu.pipeline_mode<synchronous>, transform_indices = @transform_8, window_bounds = array<i64: 1, 128>}, {transform_indices = @transform_9, window_bounds = array<i64: 8, 128>}]} {
    %c0 = arith.constant 0 : index
    %c0_0 = arith.constant 0 : index
    %0 = vector.load %arg1[%c0, %c0_0] : memref<8x16xf32, #tpu.memory_space<vmem>>, vector<8x16xf32>
    %c0_1 = arith.constant 0 : index
    %c0_2 = arith.constant 0 : index
    %1 = vector.load %arg3[%c0_1, %c0_2] : memref<16x32xf32, #tpu.memory_space<vmem>>, vector<16x32xf32>
    %cst = arith.constant dense<0.000000e+00> : vector<8x32xf32>
    %2 = tpu.matmul %0, %1, %cst {dimension_numbers = #tpu.dot_dimension_numbers<[1], [0], [0], [1], [0, 0, 1, 1], [], []>} : vector<8x16xf32>, vector<16x32xf32>, vector<8x32xf32> -> vector<8x32xf32>
    %c0_3 = arith.constant 0 : index
    %c0_4 = arith.constant 0 : index
    %3 = vector.load %arg2[%c0_3, %c0_4] : memref<8x4xf32, #tpu.memory_space<vmem>>, vector<8x4xf32>
    %c0_5 = arith.constant 0 : index
    %c0_6 = arith.constant 0 : index
    %4 = vector.load %arg4[%c0_5, %c0_6] : memref<4x32xf32, #tpu.memory_space<vmem>>, vector<4x32xf32>
    %cst_7 = arith.constant dense<0.000000e+00> : vector<8x32xf32>
    %5 = tpu.matmul %3, %4, %cst_7 {dimension_numbers = #tpu.dot_dimension_numbers<[1], [0], [0], [1], [0, 0, 1, 1], [], []>} : vector<8x4xf32>, vector<4x32xf32>, vector<8x32xf32> -> vector<8x32xf32>
    %6 = arith.addf %2, %5 : vector<8x32xf32>
    %c0_8 = arith.constant 0 : index
    %c0_9 = arith.constant 0 : index
    %7 = vector.load %arg5[%c0_8, %c0_9] : memref<1x32xf32, #tpu.memory_space<vmem>>, vector<1x32xf32>
    %8 = vector.broadcast %7 : vector<1x32xf32> to vector<8x32xf32>
    %9 = arith.addf %6, %8 : vector<8x32xf32>
    %cst_10 = arith.constant 0.000000e+00 : f32
    %10 = vector.broadcast %cst_10 : f32 to vector<8x32xf32>
    %11 = arith.maximumf %9, %10 : vector<8x32xf32>
    %c0_11 = arith.constant 0 : index
    %c0_12 = arith.constant 0 : index
    %12 = vector.load %arg6[%c0_11, %c0_12] : memref<32x32xf32, #tpu.memory_space<vmem>>, vector<32x32xf32>
    %cst_13 = arith.constant dense<0.000000e+00> : vector<8x32xf32>
    %13 = tpu.matmul %11, %12, %cst_13 {dimension_numbers = #tpu.dot_dimension_numbers<[1], [0], [0], [1], [0, 0, 1, 1], [], []>} : vector<8x32xf32>, vector<32x32xf32>, vector<8x32xf32> -> vector<8x32xf32>
    %c0_14 = arith.constant 0 : index
    %c0_15 = arith.constant 0 : index
    %14 = vector.load %arg7[%c0_14, %c0_15] : memref<1x32xf32, #tpu.memory_space<vmem>>, vector<1x32xf32>
    %15 = vector.broadcast %14 : vector<1x32xf32> to vector<8x32xf32>
    %16 = arith.addf %13, %15 : vector<8x32xf32>
    %cst_16 = arith.constant 0.000000e+00 : f32
    %17 = vector.broadcast %cst_16 : f32 to vector<8x32xf32>
    %18 = arith.maximumf %16, %17 : vector<8x32xf32>
    %c0_17 = arith.constant 0 : index
    %c0_18 = arith.constant 0 : index
    %19 = vector.load %arg8[%c0_17, %c0_18] : memref<32x128xf32, #tpu.memory_space<vmem>>, vector<32x128xf32>
    %cst_19 = arith.constant dense<0.000000e+00> : vector<8x128xf32>
    %20 = tpu.matmul %18, %19, %cst_19 {dimension_numbers = #tpu.dot_dimension_numbers<[1], [0], [0], [1], [0, 0, 1, 1], [], []>} : vector<8x32xf32>, vector<32x128xf32>, vector<8x128xf32> -> vector<8x128xf32>
    %c0_20 = arith.constant 0 : index
    %c0_21 = arith.constant 0 : index
    %21 = vector.load %arg9[%c0_20, %c0_21] : memref<1x128xf32, #tpu.memory_space<vmem>>, vector<1x128xf32>
    %22 = vector.broadcast %21 : vector<1x128xf32> to vector<8x128xf32>
    %23 = arith.addf %20, %22 : vector<8x128xf32>
    %c0_22 = arith.constant 0 : index
    %c0_23 = arith.constant 0 : index
    %24 = vector.load %arg10[%c0_22, %c0_23] : memref<8x128xf32, #tpu.memory_space<vmem>>, vector<8x128xf32>
    tpu.vector_store %arg10[%c0_22, %c0_23], %23 {strides = array<i32>} : memref<8x128xf32, #tpu.memory_space<vmem>>, vector<8x128xf32>,
    return
  }
  func.func @transform_0(%arg0: i32) -> (i32, i32) {
    %c0_i32 = arith.constant 0 : i32
    %c0_i32_0 = arith.constant 0 : i32
    return %arg0, %c0_i32 : i32, i32
  }
  func.func @transform_1(%arg0: i32) -> (i32, i32) {
    %c0_i32 = arith.constant 0 : i32
    %c0_i32_0 = arith.constant 0 : i32
    return %arg0, %c0_i32 : i32, i32
  }
  func.func @transform_2(%arg0: i32) -> (i32, i32) {
    %c0_i32 = arith.constant 0 : i32
    %c0_i32_0 = arith.constant 0 : i32
    %c0_i32_1 = arith.constant 0 : i32
    return %c0_i32, %c0_i32_0 : i32, i32
  }
  func.func @transform_3(%arg0: i32) -> (i32, i32) {
    %c0_i32 = arith.constant 0 : i32
    %c0_i32_0 = arith.constant 0 : i32
    %c0_i32_1 = arith.constant 0 : i32
    return %c0_i32, %c0_i32_0 : i32, i32
  }
  func.func @transform_4(%arg0: i32) -> (i32, i32) {
    %c0_i32 = arith.constant 0 : i32
    %c0_i32_0 = arith.constant 0 : i32
    %c0_i32_1 = arith.constant 0 : i32
    return %c0_i32, %c0_i32_0 : i32, i32
  }
  func.func @transform_5(%arg0: i32) -> (i32, i32) {
    %c0_i32 = arith.constant 0 : i32
    %c0_i32_0 = arith.constant 0 : i32
    %c0_i32_1 = arith.constant 0 : i32
    return %c0_i32, %c0_i32_0 : i32, i32
  }
  func.func @transform_6(%arg0: i32) -> (i32, i32) {
    %c0_i32 = arith.constant 0 : i32
    %c0_i32_0 = arith.constant 0 : i32
    %c0_i32_1 = arith.constant 0 : i32
    return %c0_i32, %c0_i32_0 : i32, i32
  }
  func.func @transform_7(%arg0: i32) -> (i32, i32) {
    %c0_i32 = arith.constant 0 : i32
    %c0_i32_0 = arith.constant 0 : i32
    %c0_i32_1 = arith.constant 0 : i32
    return %c0_i32, %c0_i32_0 : i32, i32
  }
  func.func @transform_8(%arg0: i32) -> (i32, i32) {
    %c0_i32 = arith.constant 0 : i32
    %c0_i32_0 = arith.constant 0 : i32
    %c0_i32_1 = arith.constant 0 : i32
    return %c0_i32, %c0_i32_0 : i32, i32
  }
  func.func @transform_9(%arg0: i32) -> (i32, i32) {
    %c0_i32 = arith.constant 0 : i32
    %c0_i32_0 = arith.constant 0 : i32
    return %arg0, %c0_i32 : i32, i32
  }
}

</mosaic_0001>

<llo_original>
// kernel: tpu_custom_call.1
$region0: #{tpu_custom_call.1}
  #allocation0 [shape = 'u32[]', space=smem, size = 0x4, offset = 0x4, fixed_abs, tag = 'smem constant byte address 0x4 - core index']
  #allocation1 [shape = 'u32[144,128]{1,0:T(1,128)}', space=vmem, size = 0x12000, scoped, tag = 'internal scratch']
  %s0 = inlined_call_operand.hbm [shape: f32[8,16], index: 0, kind: input, shape index: {}]
  %s1 = inlined_call_operand.vmem [shape: f32[8,4], index: 1, kind: input, shape index: {}]
  %s2 = inlined_call_operand.hbm [shape: f32[16,32], index: 2, kind: input, shape index: {}]
  %s3 = inlined_call_operand.vmem [shape: f32[4,32], index: 3, kind: input, shape index: {}]
  %s4 = inlined_call_operand.vmem [shape: f32[1,32], index: 4, kind: input, shape index: {}]
  %s5 = inlined_call_operand.hbm [shape: f32[32,32], index: 5, kind: input, shape index: {}]
  %s6 = inlined_call_operand.vmem [shape: f32[1,32], index: 6, kind: input, shape index: {}]
  %s7 = inlined_call_operand.vmem [shape: f32[32,128], index: 7, kind: input, shape index: {}]
  %s8 = inlined_call_operand.vmem [shape: f32[1,128], index: 8, kind: input, shape index: {}]
  %s9 = inlined_call_operand.hbm [shape: f32[8,128], index: 9, kind: output, shape index: {}]
  %s10 = sld [smem:[#allocation0]]
  $region58: #{tpu_custom_call.1} parent=0
    _
  %s12 = ssub.s32 1, %s10
  %s13 = scalar_select 0, %s12, %s10
  $region1: #{tpu_custom_call.1} parent=0
    #allocation2 [shape = 'u8[4096]{0}', space=vmem, size = 0x1000, scoped, tag = 'input window, operand 0, single buffered']
    #allocation3 [shape = 's32[1]{0}', space=sflag, size = 0x4, scoped, tag = 'scoped memory for tpu_custom_call.1']
    #allocation4 [shape = 's32[1]{0}', space=sflag, size = 0x4, scoped, tag = 'scoped memory for tpu_custom_call.1']
    #allocation5 [shape = 'u8[8192]{0}', space=vmem, size = 0x2000, scoped, tag = 'input window, operand 2, single buffered']
    #allocation6 [shape = 's32[1]{0}', space=sflag, size = 0x4, scoped, tag = 'scoped memory for tpu_custom_call.1']
    #allocation7 [shape = 'u8[16384]{0}', space=vmem, size = 0x4000, scoped, tag = 'input window, operand 5, single buffered']
    #allocation8 [shape = 'u8[4096]{0}', space=vmem, size = 0x1000, scoped, tag = 'output window, operand 0, single buffered']
    %14 = vsyncpa [#allocation3], 0
    %15 = vsyncpa [#allocation6], 0
    %16 = vsyncpa [#allocation4], 0
    // Predicated region
    $region2: #{tpu_custom_call.1} parent=1 // pred_check
      _
    $region3: #{tpu_custom_call.1} parent=1 // pred_check_branch
      %18 = sbr.rel (0) target = $region5
    $region4: #{tpu_custom_call.1} parent=1 // pred_region
      %s20 = ssub.s32 128, 128
      %21 = vsyncadd [#allocation3], %s20
      %s23 = sshll.u32 [#allocation2], 4
      %s24 = int_to_ptr.vmem [resolvable:$true] %s23
      %26 = dma.hbm_to_vmem [thread:$0]  %s0, 128, %s24, [#allocation3]
    $region5: #{tpu_custom_call.1} parent=1 // pred_fallthru
      _
    // Predicated region
    $region6: #{tpu_custom_call.1} parent=1 // pred_check
      _
    $region7: #{tpu_custom_call.1} parent=1 // pred_check_branch
      %28 = sbr.rel (0) target = $region9
    $region8: #{tpu_custom_call.1} parent=1 // pred_region
      _
    $region9: #{tpu_custom_call.1} parent=1 // pred_fallthru
      _
    // Predicated region
    $region10: #{tpu_custom_call.1} parent=1 // pred_check
      _
    $region11: #{tpu_custom_call.1} parent=1 // pred_check_branch
      %30 = sbr.rel (0) target = $region13
    $region12: #{tpu_custom_call.1} parent=1 // pred_region
      %s32 = ssub.s32 256, 256
      %33 = vsyncadd [#allocation6], %s32
      %s34 = sshll.u32 [#allocation5], 4
      %s35 = int_to_ptr.vmem [resolvable:$true] %s34
      %40 = dma.hbm_to_vmem [thread:$0]  %s2, 256, %s35, [#allocation6], 128, 128, 8
    $region13: #{tpu_custom_call.1} parent=1 // pred_fallthru
      _
    // Predicated region
    $region14: #{tpu_custom_call.1} parent=1 // pred_check
      _
    $region15: #{tpu_custom_call.1} parent=1 // pred_check_branch
      %42 = sbr.rel (0) target = $region17
    $region16: #{tpu_custom_call.1} parent=1 // pred_region
      _
    $region17: #{tpu_custom_call.1} parent=1 // pred_fallthru
      _
    // Predicated region
    $region18: #{tpu_custom_call.1} parent=1 // pred_check
      _
    $region19: #{tpu_custom_call.1} parent=1 // pred_check_branch
      %44 = sbr.rel (0) target = $region21
    $region20: #{tpu_custom_call.1} parent=1 // pred_region
      _
    $region21: #{tpu_custom_call.1} parent=1 // pred_fallthru
      _
    // Predicated region
    $region22: #{tpu_custom_call.1} parent=1 // pred_check
      _
    $region23: #{tpu_custom_call.1} parent=1 // pred_check_branch
      %46 = sbr.rel (0) target = $region25
    $region24: #{tpu_custom_call.1} parent=1 // pred_region
      %s48 = ssub.s32 512, 512
      %49 = vsyncadd [#allocation6], %s48
      %s50 = sshll.u32 [#allocation7], 4
      %s51 = int_to_ptr.vmem [resolvable:$true] %s50
      %56 = dma.hbm_to_vmem [thread:$0]  %s5, 512, %s51, [#allocation6], 128, 128, 8
    $region25: #{tpu_custom_call.1} parent=1 // pred_fallthru
      _
    // Predicated region
    $region26: #{tpu_custom_call.1} parent=1 // pred_check
      _
    $region27: #{tpu_custom_call.1} parent=1 // pred_check_branch
      %58 = sbr.rel (0) target = $region29
    $region28: #{tpu_custom_call.1} parent=1 // pred_region
      _
    $region29: #{tpu_custom_call.1} parent=1 // pred_fallthru
      _
    // Predicated region
    $region30: #{tpu_custom_call.1} parent=1 // pred_check
      _
    $region31: #{tpu_custom_call.1} parent=1 // pred_check_branch
      %60 = sbr.rel (0) target = $region33
    $region32: #{tpu_custom_call.1} parent=1 // pred_region
      _
    $region33: #{tpu_custom_call.1} parent=1 // pred_fallthru
      _
    // Predicated region
    $region34: #{tpu_custom_call.1} parent=1 // pred_check
      _
    $region35: #{tpu_custom_call.1} parent=1 // pred_check_branch
      %62 = sbr.rel (0) target = $region37
    $region36: #{tpu_custom_call.1} parent=1 // pred_region
      _
    $region37: #{tpu_custom_call.1} parent=1 // pred_fallthru
      _
    // Predicated region
    $region38: #{tpu_custom_call.1} parent=1 // pred_check
      _
    $region39: #{tpu_custom_call.1} parent=1 // pred_check_branch
      %64 = sbr.rel (0) target = $region41
    $region40: #{tpu_custom_call.1} parent=1 // pred_region
      %65 = dma.done [#allocation3], 128
    $region41: #{tpu_custom_call.1} parent=1 // pred_fallthru
      _
    // Predicated region
    $region42: #{tpu_custom_call.1} parent=1 // pred_check
      _
    $region43: #{tpu_custom_call.1} parent=1 // pred_check_branch
      %67 = sbr.rel (0) target = $region45
    $region44: #{tpu_custom_call.1} parent=1 // pred_region
      %68 = dma.done [#allocation6], 256
    $region45: #{tpu_custom_call.1} parent=1 // pred_fallthru
      _
    // Predicated region
    $region46: #{tpu_custom_call.1} parent=1 // pred_check
      _
    $region47: #{tpu_custom_call.1} parent=1 // pred_check_branch
      %70 = sbr.rel (0) target = $region49
    $region48: #{tpu_custom_call.1} parent=1 // pred_region
      %71 = dma.done [#allocation6], 512
    $region49: #{tpu_custom_call.1} parent=1 // pred_fallthru
      _
    %v72 = vld [vmem:[#allocation2] sm:$0xff]
    %v73 = vld [vmem:[#allocation5] sm:$0xff]
    %v74 = vld [vmem:[#allocation5 + $0x8] sm:$0xff]
    %v75 = vld [vmem:[%s1] sm:$0xff]
    %v76 = vld [vmem:[%s3] sm:$0xf]
    %vm77 = vcmask 31744
    %v79 = vsel %vm77, %v75, 0
    %vm81 = vcmask 1043456
    %v83 = vsel %vm81, %v76, 0
    %85 = vmatprep.subr.mxu0 0.0
    %86 = vmatpush1.msra.mxu0 %v83
    %87 = vmatprep.subr.mxu0 0.0
    %88 = vmatpush1.msra.mxu0 0.0
    %89 = vmatprep.subr.mxu0 0.0
    %90 = vmatpush1.msra.mxu0 0.0
    %91 = vmatprep.subr.mxu0 0.0
    %92 = vmatpush1.msra.mxu0 0.0
    %93 = vmatprep.subr.mxu0 0.0
    %94 = vmatpush1.msra.mxu0 0.0
    %95 = vmatprep.subr.mxu0 0.0
    %96 = vmatpush1.msra.mxu0 0.0
    %97 = vmatprep.subr.mxu0 0.0
    %98 = vmatpush1.msra.mxu0 0.0
    %99 = vmatprep.subr.mxu0 0.0
    %100 = vmatpush1.msra.mxu0 0.0
    %101 = vmatprep.subr.mxu0 0.0
    %102 = vmatpush1.msra.mxu0 0.0
    %103 = vmatprep.subr.mxu0 0.0
    %104 = vmatpush1.msra.mxu0 0.0
    %105 = vmatprep.subr.mxu0 0.0
    %106 = vmatpush1.msra.mxu0 0.0
    %107 = vmatprep.subr.mxu0 0.0
    %108 = vmatpush1.msra.mxu0 0.0
    %109 = vmatprep.subr.mxu0 0.0
    %110 = vmatpush1.msra.mxu0 0.0
    %111 = vmatprep.subr.mxu0 0.0
    %112 = vmatpush1.msra.mxu0 0.0
    %113 = vmatprep.subr.mxu0 0.0
    %114 = vmatpush1.msra.mxu0 0.0
    %115 = vmatprep.subr.mxu0 0.0
    %116 = vmatpush1.msra.mxu0 0.0
    %117 = vmatprep.subr.mxu0 0.0
    %118 = vmatpush1.msra.mxu0 0.0
    %119 = vmatprep.subr.mxu0 0.0
    %120 = vmatpush1.msra.mxu0 0.0
    %121 = vmatprep.subr.mxu0 0.0
    %122 = vmatpush1.msra.mxu0 0.0
    %123 = vmatprep.subr.mxu0 0.0
    %124 = vmatpush1.msra.mxu0 0.0
    %125 = vmatprep.subr.mxu0 0.0
    %126 = vmatpush1.msra.mxu0 0.0
    %127 = vmatprep.subr.mxu0 0.0
    %128 = vmatpush1.msra.mxu0 0.0
    %129 = vmatprep.subr.mxu0 0.0
    %130 = vmatpush1.msra.mxu0 0.0
    %131 = vmatprep.subr.mxu0 0.0
    %132 = vmatpush1.msra.mxu0 0.0
    %133 = vmatprep.subr.mxu0 0.0
    %134 = vmatpush1.msra.mxu0 0.0
    %135 = vmatprep.subr.mxu0 0.0
    %136 = vmatpush1.msra.mxu0 0.0
    %137 = vmatprep.subr.mxu0 0.0
    %138 = vmatpush1.msra.mxu0 0.0
    %139 = vmatprep.subr.mxu0 0.0
    %140 = vmatpush1.msra.mxu0 0.0
    %141 = vmatprep.subr.mxu0 0.0
    %142 = vmatpush1.msra.mxu0 0.0
    %143 = vmatprep.subr.mxu0 0.0
    %144 = vmatpush1.msra.mxu0 0.0
    %145 = vmatprep.subr.mxu0 0.0
    %146 = vmatpush1.msra.mxu0 0.0
    %147 = vmatprep.subr.mxu0 0.0
    %148 = vmatpush1.msra.mxu0 0.0
    %149 = vmatprep.mubr.f32.mxu0 0.0
    %150 = vmatmul.mubr.f32.gmra.mrb[0].mxu0 %v79
    %v151 = vpop.f32.mrb[0].mxu0
    %v152 = vadd.f32 0.0, %v151
    %v153 = vpop.f32.mrb[0].mxu0
    %154 = vdwg.mxu0
    %vm155 = vcmask 130048
    %v157 = vsel %vm155, %v72, 0
    %159 = vmatprep.subr.mxu0 0.0
    %160 = vmatpush1.msra.mxu0 %v73
    %161 = vmatprep.subr.mxu0 0.0
    %162 = vmatpush1.msra.mxu0 %v74
    %163 = vmatprep.subr.mxu0 0.0
    %164 = vmatpush1.msra.mxu0 0.0
    %165 = vmatprep.subr.mxu0 0.0
    %166 = vmatpush1.msra.mxu0 0.0
    %167 = vmatprep.subr.mxu0 0.0
    %168 = vmatpush1.msra.mxu0 0.0
    %169 = vmatprep.subr.mxu0 0.0
    %170 = vmatpush1.msra.mxu0 0.0
    %171 = vmatprep.subr.mxu0 0.0
    %172 = vmatpush1.msra.mxu0 0.0
    %173 = vmatprep.subr.mxu0 0.0
    %174 = vmatpush1.msra.mxu0 0.0
    %175 = vmatprep.subr.mxu0 0.0
    %176 = vmatpush1.msra.mxu0 0.0
    %177 = vmatprep.subr.mxu0 0.0
    %178 = vmatpush1.msra.mxu0 0.0
    %179 = vmatprep.subr.mxu0 0.0
    %180 = vmatpush1.msra.mxu0 0.0
    %181 = vmatprep.subr.mxu0 0.0
    %182 = vmatpush1.msra.mxu0 0.0
    %183 = vmatprep.subr.mxu0 0.0
    %184 = vmatpush1.msra.mxu0 0.0
    %185 = vmatprep.subr.mxu0 0.0
    %186 = vmatpush1.msra.mxu0 0.0
    %187 = vmatprep.subr.mxu0 0.0
    %188 = vmatpush1.msra.mxu0 0.0
    %189 = vmatprep.subr.mxu0 0.0
    %190 = vmatpush1.msra.mxu0 0.0
    %191 = vmatprep.subr.mxu0 0.0
    %192 = vmatpush1.msra.mxu0 0.0
    %193 = vmatprep.subr.mxu0 0.0
    %194 = vmatpush1.msra.mxu0 0.0
    %195 = vmatprep.subr.mxu0 0.0
    %196 = vmatpush1.msra.mxu0 0.0
    %197 = vmatprep.subr.mxu0 0.0
    %198 = vmatpush1.msra.mxu0 0.0
    %199 = vmatprep.subr.mxu0 0.0
    %200 = vmatpush1.msra.mxu0 0.0
    %201 = vmatprep.subr.mxu0 0.0
    %202 = vmatpush1.msra.mxu0 0.0
    %203 = vmatprep.subr.mxu0 0.0
    %204 = vmatpush1.msra.mxu0 0.0
    %205 = vmatprep.subr.mxu0 0.0
    %206 = vmatpush1.msra.mxu0 0.0
    %207 = vmatprep.subr.mxu0 0.0
    %208 = vmatpush1.msra.mxu0 0.0
    %209 = vmatprep.subr.mxu0 0.0
    %210 = vmatpush1.msra.mxu0 0.0
    %211 = vmatprep.subr.mxu0 0.0
    %212 = vmatpush1.msra.mxu0 0.0
    %213 = vmatprep.subr.mxu0 0.0
    %214 = vmatpush1.msra.mxu0 0.0
    %215 = vmatprep.subr.mxu0 0.0
    %216 = vmatpush1.msra.mxu0 0.0
    %217 = vmatprep.subr.mxu0 0.0
    %218 = vmatpush1.msra.mxu0 0.0
    %219 = vmatprep.subr.mxu0 0.0
    %220 = vmatpush1.msra.mxu0 0.0
    %221 = vmatprep.subr.mxu0 0.0
    %222 = vmatpush1.msra.mxu0 0.0
    %223 = vmatprep.mubr.f32.mxu0 0.0
    %224 = vmatmul.mubr.f32.gmra.mrb[0].mxu0 %v157
    %v225 = vpop.f32.mrb[0].mxu0
    %v226 = vadd.f32 %v152, %v225
    %v227 = vpop.f32.mrb[0].mxu0
    %228 = vdwg.mxu0
    %v229 = vld [vmem:[%s4] sm:$0x1]
    %v231 = vlaneseq
    %v232 = vshrl.u32 %v231, 7
    %v233 = vsub.s32 0, %v232
    %v234 = vrot.slane %v229, %v233
    %v236 = vadd.f32 %v226, %v234
    %v237 = vmax.f32 %v236, 0.0
    %v238 = vld [vmem:[#allocation7] sm:$0xff]
    %v239 = vld [vmem:[#allocation7 + $0x8] sm:$0xff]
    %v240 = vld [vmem:[#allocation7 + $0x10] sm:$0xff]
    %v241 = vld [vmem:[#allocation7 + $0x18] sm:$0xff]
    %v242 = vld [vmem:[%s6] sm:$0x1]
    %v244 = vlaneseq
    %v245 = vshrl.u32 %v244, 7
    %v246 = vsub.s32 0, %v245
    %v247 = vrot.slane %v242, %v246
    %vm249 = vcmask 261120
    %v251 = vsel %vm249, %v237, 0
    %253 = vmatprep.subr.mxu0 0.0
    %254 = vmatpush1.msra.mxu0 %v238
    %255 = vmatprep.subr.mxu0 0.0
    %256 = vmatpush1.msra.mxu0 %v239
    %257 = vmatprep.subr.mxu0 0.0
    %258 = vmatpush1.msra.mxu0 %v240
    %259 = vmatprep.subr.mxu0 0.0
    %260 = vmatpush1.msra.mxu0 %v241
    %261 = vmatprep.subr.mxu0 0.0
    %262 = vmatpush1.msra.mxu0 0.0
    %263 = vmatprep.subr.mxu0 0.0
    %264 = vmatpush1.msra.mxu0 0.0
    %265 = vmatprep.subr.mxu0 0.0
    %266 = vmatpush1.msra.mxu0 0.0
    %267 = vmatprep.subr.mxu0 0.0
    %268 = vmatpush1.msra.mxu0 0.0
    %269 = vmatprep.subr.mxu0 0.0
    %270 = vmatpush1.msra.mxu0 0.0
    %271 = vmatprep.subr.mxu0 0.0
    %272 = vmatpush1.msra.mxu0 0.0
    %273 = vmatprep.subr.mxu0 0.0
    %274 = vmatpush1.msra.mxu0 0.0
    %275 = vmatprep.subr.mxu0 0.0
    %276 = vmatpush1.msra.mxu0 0.0
    %277 = vmatprep.subr.mxu0 0.0
    %278 = vmatpush1.msra.mxu0 0.0
    %279 = vmatprep.subr.mxu0 0.0
    %280 = vmatpush1.msra.mxu0 0.0
    %281 = vmatprep.subr.mxu0 0.0
    %282 = vmatpush1.msra.mxu0 0.0
    %283 = vmatprep.subr.mxu0 0.0
    %284 = vmatpush1.msra.mxu0 0.0
    %285 = vmatprep.subr.mxu0 0.0
    %286 = vmatpush1.msra.mxu0 0.0
    %287 = vmatprep.subr.mxu0 0.0
    %288 = vmatpush1.msra.mxu0 0.0
    %289 = vmatprep.subr.mxu0 0.0
    %290 = vmatpush1.msra.mxu0 0.0
    %291 = vmatprep.subr.mxu0 0.0
    %292 = vmatpush1.msra.mxu0 0.0
    %293 = vmatprep.subr.mxu0 0.0
    %294 = vmatpush1.msra.mxu0 0.0
    %295 = vmatprep.subr.mxu0 0.0
    %296 = vmatpush1.msra.mxu0 0.0
    %297 = vmatprep.subr.mxu0 0.0
    %298 = vmatpush1.msra.mxu0 0.0
    %299 = vmatprep.subr.mxu0 0.0
    %300 = vmatpush1.msra.mxu0 0.0
    %301 = vmatprep.subr.mxu0 0.0
    %302 = vmatpush1.msra.mxu0 0.0
    %303 = vmatprep.subr.mxu0 0.0
    %304 = vmatpush1.msra.mxu0 0.0
    %305 = vmatprep.subr.mxu0 0.0
    %306 = vmatpush1.msra.mxu0 0.0
    %307 = vmatprep.subr.mxu0 0.0
    %308 = vmatpush1.msra.mxu0 0.0
    %309 = vmatprep.subr.mxu0 0.0
    %310 = vmatpush1.msra.mxu0 0.0
    %311 = vmatprep.subr.mxu0 0.0
    %312 = vmatpush1.msra.mxu0 0.0
    %313 = vmatprep.subr.mxu0 0.0
    %314 = vmatpush1.msra.mxu0 0.0
    %315 = vmatprep.subr.mxu0 0.0
    %316 = vmatpush1.msra.mxu0 0.0
    %317 = vmatprep.mubr.f32.mxu0 0.0
    %318 = vmatmul.mubr.f32.gmra.mrb[0].mxu0 %v251
    %v319 = vpop.f32.mrb[0].mxu0
    %v320 = vadd.f32 %v247, %v319
    %v321 = vpop.f32.mrb[0].mxu0
    %322 = vdwg.mxu0
    %v323 = vmax.f32 %v320, 0.0
    %v324 = vld [vmem:[%s7] sm:$0xff]
    %v325 = vld [vmem:[%s7 + $0x8] sm:$0xff]
    %v326 = vld [vmem:[%s7 + $0x10] sm:$0xff]
    %v327 = vld [vmem:[%s7 + $0x18] sm:$0xff]
    %v328 = vld [vmem:[%s8] sm:$0x1]
    %v330 = vlaneseq
    %v331 = vshrl.u32 %v330, 7
    %v332 = vsub.s32 0, %v331
    %v333 = vrot.slane %v328, %v332
    %v336 = vsel %vm249, %v323, 0
    %338 = vmatprep.subr.mxu0 0.0
    %339 = vmatpush1.msra.mxu0 %v324
    %340 = vmatprep.subr.mxu0 0.0
    %341 = vmatpush1.msra.mxu0 %v325
    %342 = vmatprep.subr.mxu0 0.0
    %343 = vmatpush1.msra.mxu0 %v326
    %344 = vmatprep.subr.mxu0 0.0
    %345 = vmatpush1.msra.mxu0 %v327
    %346 = vmatprep.subr.mxu0 0.0
    %347 = vmatpush1.msra.mxu0 0.0
    %348 = vmatprep.subr.mxu0 0.0
    %349 = vmatpush1.msra.mxu0 0.0
    %350 = vmatprep.subr.mxu0 0.0
    %351 = vmatpush1.msra.mxu0 0.0
    %352 = vmatprep.subr.mxu0 0.0
    %353 = vmatpush1.msra.mxu0 0.0
    %354 = vmatprep.subr.mxu0 0.0
    %355 = vmatpush1.msra.mxu0 0.0
    %356 = vmatprep.subr.mxu0 0.0
    %357 = vmatpush1.msra.mxu0 0.0
    %358 = vmatprep.subr.mxu0 0.0
    %359 = vmatpush1.msra.mxu0 0.0
    %360 = vmatprep.subr.mxu0 0.0
    %361 = vmatpush1.msra.mxu0 0.0
    %362 = vmatprep.subr.mxu0 0.0
    %363 = vmatpush1.msra.mxu0 0.0
    %364 = vmatprep.subr.mxu0 0.0
    %365 = vmatpush1.msra.mxu0 0.0
    %366 = vmatprep.subr.mxu0 0.0
    %367 = vmatpush1.msra.mxu0 0.0
    %368 = vmatprep.subr.mxu0 0.0
    %369 = vmatpush1.msra.mxu0 0.0
    %370 = vmatprep.subr.mxu0 0.0
    %371 = vmatpush1.msra.mxu0 0.0
    %372 = vmatprep.subr.mxu0 0.0
    %373 = vmatpush1.msra.mxu0 0.0
    %374 = vmatprep.subr.mxu0 0.0
    %375 = vmatpush1.msra.mxu0 0.0
    %376 = vmatprep.subr.mxu0 0.0
    %377 = vmatpush1.msra.mxu0 0.0
    %378 = vmatprep.subr.mxu0 0.0
    %379 = vmatpush1.msra.mxu0 0.0
    %380 = vmatprep.subr.mxu0 0.0
    %381 = vmatpush1.msra.mxu0 0.0
    %382 = vmatprep.subr.mxu0 0.0
    %383 = vmatpush1.msra.mxu0 0.0
    %384 = vmatprep.subr.mxu0 0.0
    %385 = vmatpush1.msra.mxu0 0.0
    %386 = vmatprep.subr.mxu0 0.0
    %387 = vmatpush1.msra.mxu0 0.0
    %388 = vmatprep.subr.mxu0 0.0
    %389 = vmatpush1.msra.mxu0 0.0
    %390 = vmatprep.subr.mxu0 0.0
    %391 = vmatpush1.msra.mxu0 0.0
    %392 = vmatprep.subr.mxu0 0.0
    %393 = vmatpush1.msra.mxu0 0.0
    %394 = vmatprep.subr.mxu0 0.0
    %395 = vmatpush1.msra.mxu0 0.0
    %396 = vmatprep.subr.mxu0 0.0
    %397 = vmatpush1.msra.mxu0 0.0
    %398 = vmatprep.subr.mxu0 0.0
    %399 = vmatpush1.msra.mxu0 0.0
    %400 = vmatprep.subr.mxu0 0.0
    %401 = vmatpush1.msra.mxu0 0.0
    %402 = vmatprep.mubr.f32.mxu0 0.0
    %403 = vmatmul.mubr.f32.gmra.mrb[0].mxu0 %v336
    %v404 = vpop.f32.mrb[0].mxu0
    %v405 = vadd.f32 %v333, %v404
    %v406 = vpop.f32.mrb[0].mxu0
    %407 = vdwg.mxu0
    %408 = vst [vmem:[#allocation8] sm:$0xff] %v405
    // Predicated region
    $region50: #{tpu_custom_call.1} parent=1 // pred_check
      _
    $region51: #{tpu_custom_call.1} parent=1 // pred_check_branch
      %410 = sbr.rel (0) target = $region53
    $region52: #{tpu_custom_call.1} parent=1 // pred_region
      %s412 = ssub.s32 128, 128
      %413 = vsyncadd [#allocation4], %s412
      %s415 = sshll.u32 [#allocation8], 4
      %s416 = int_to_ptr.vmem [resolvable:$true] %s415
      %418 = dma.vmem_to_hbm [thread:$0]  %s416, 128, %s9, [#allocation4]
    $region53: #{tpu_custom_call.1} parent=1 // pred_fallthru
      _
    // Predicated region
    $region54: #{tpu_custom_call.1} parent=1 // pred_check
      _
    $region55: #{tpu_custom_call.1} parent=1 // pred_check_branch
      %420 = sbr.rel (0) target = $region57
    $region56: #{tpu_custom_call.1} parent=1 // pred_region
      %421 = dma.done [#allocation4], 128
    $region57: #{tpu_custom_call.1} parent=1 // pred_fallthru
      _
    %422 = vsyncpa [#allocation3], 1
    %423 = vsyncpa [#allocation6], 1
    %424 = vsyncpa [#allocation4], 1

</llo_original>
